<compile_context>
chip_gen: v7x
topology: tpu7x:2x2x1
jax: 0.10.0
libtpu: 0.0.40
codegen_flags: <defaults>
</compile_context>

<pallas_src>
import jax
import jax.numpy as jnp
from jax.experimental import pallas as pl
from jax.experimental.pallas import tpu as pltpu

_LANE = 128
_NEG_BIG = jnp.float32(-1e30)  # masks padded action logits (exp underflows to 0)


def _round_up(n, m):
    return ((n + m - 1) // m) * m


def _policy_kernel(x_ref, w1_ref, b1_ref, w2_ref, b2_ref, w3_ref, b3_ref,
                   probs_ref):
    # x is bf16 (TB, dim_state); weights bf16; biases f32.
    x = x_ref[...]

    # Layer 1: Linear (bf16 MXU, f32 acc) + LeakyReLU(0.01)
    h1 = jnp.dot(x, w1_ref[...], preferred_element_type=jnp.float32) + b1_ref[...]
    h1 = jnp.maximum(h1, 0.01 * h1)

    # Layer 2
    h2 = jnp.dot(h1.astype(jnp.bfloat16), w2_ref[...],
                 preferred_element_type=jnp.float32) + b2_ref[...]
    h2 = jnp.maximum(h2, 0.01 * h2)

    # Layer 3 + softmax over the (lane-padded) action dim.
    logits = jnp.dot(h2.astype(jnp.bfloat16), w3_ref[...],
                     preferred_element_type=jnp.float32) + b3_ref[...]
    m = jnp.max(logits, axis=-1, keepdims=True)
    e = jnp.exp(logits - m)
    denom = jnp.sum(e, axis=-1, keepdims=True)
    probs_ref[...] = (e * pl.reciprocal(denom, approx=True)).astype(probs_ref.dtype)


def discrete_policy_forward(x, params, *, block_b=256):
    """Returns action_probs of shape (B, dim_action), float32."""
    w1, b1, w2, b2, w3, b3 = params
    B, dim_state = x.shape
    dim_hidden = w1.shape[1]
    dim_action = w3.shape[1]

    # --- lane-dense output: pad action dim to a multiple of 128 lanes ---
    a_pad = _round_up(max(dim_action, _LANE), _LANE)
    w3p = jnp.zeros((dim_hidden, a_pad), jnp.float32).at[:, :dim_action].set(w3)
    b3p = jnp.full((1, a_pad), _NEG_BIG, jnp.float32).at[:, :dim_action].set(b3)

    # --- batch tiling (pad B up so the tile divides it exactly) ---
    tb = min(block_b, _round_up(B, 8))
    b_pad = _round_up(B, tb)
    xp = x
    if b_pad != B:
        xp = jnp.concatenate(
            [x, jnp.zeros((b_pad - B, dim_state), x.dtype)], axis=0)

    # bf16 MXU inputs (also halves x / weight DMA bytes); biases stay f32.
    xp = xp.astype(jnp.bfloat16)
    w1b = w1.astype(jnp.bfloat16)
    w2b = w2.astype(jnp.bfloat16)
    w3b = w3p.astype(jnp.bfloat16)

    grid = (b_pad // tb,)

    def resident(a):  # full array, same block every grid step -> stays in VMEM
        return pl.BlockSpec(a.shape, lambda i: (0,) * a.ndim)

    probs_padded = pl.pallas_call(
        _policy_kernel,
        out_shape=jax.ShapeDtypeStruct((b_pad, a_pad), jnp.float32),
        grid=grid,
        in_specs=[
            pl.BlockSpec((tb, dim_state), lambda i: (i, 0)),   # x: tiled over batch
            resident(w1b), resident(b1),
            resident(w2b), resident(b2),
            resident(w3b), resident(b3p),
        ],
        out_specs=pl.BlockSpec((tb, a_pad), lambda i: (i, 0)),
        compiler_params=pltpu.CompilerParams(
            dimension_semantics=("parallel",),        # megacore on v7x
            vmem_limit_bytes=32 * 1024 * 1024,        # explicit; safe on v5e/v6e/v7x
        ),
    )(xp, w1b, b1, w2b, b2, w3b, b3p)

    return probs_padded[:B, :dim_action]


def init_params(key, dim_state, dim_action, dim_hidden=128):
    """Xavier-normal weights (std = sqrt(2/(fan_in+fan_out))), zero biases.
    Weights stored as (in_features, out_features) so y = x @ W + b."""
    k1, k2, k3 = jax.random.split(key, 3)

    def xavier(k, fan_in, fan_out):
        std = (2.0 / (fan_in + fan_out)) ** 0.5
        return std * jax.random.normal(k, (fan_in, fan_out), dtype=jnp.float32)

    w1 = xavier(k1, dim_state, dim_hidden)
    b1 = jnp.zeros((1, dim_hidden), jnp.float32)
    w2 = xavier(k2, dim_hidden, dim_hidden)
    b2 = jnp.zeros((1, dim_hidden), jnp.float32)
    w3 = xavier(k3, dim_hidden, dim_action)
    b3 = jnp.zeros((1, dim_action), jnp.float32)
    return (w1, b1, w2, b2, w3, b3)


def _ref_forward_f32(x, params):
    w1, b1, w2, b2, w3, b3 = params
    h1 = x @ w1 + b1
    h1 = jnp.where(h1 > 0, h1, 0.01 * h1)
    h2 = h1 @ w2 + b2
    h2 = jnp.where(h2 > 0, h2, 0.01 * h2)
    return jax.nn.softmax(h2 @ w3 + b3, axis=-1)


if __name__ == "__main__":
    # Small shapes consistent with the module's forward (batch of state vectors).
    # dim_hidden uses the PyTorch default (128); dim_action=6 exercises the
    # lane-padding + masking path.
    batch, dim_state, dim_hidden, dim_action = 8, 16, 128, 6

    key = jax.random.PRNGKey(0)
    k_param, k_x = jax.random.split(key)
    params = init_params(k_param, dim_state, dim_action, dim_hidden)
    x = jax.random.normal(k_x, (batch, dim_state), dtype=jnp.float32)

    probs = discrete_policy_forward(x, params)
    probs = jax.block_until_ready(probs)

    # Correctness: compare against full-f32 pure-JAX reference. Kernel uses
    # bf16 MXU inputs + approx reciprocal, so tolerances are loosened slightly.
    ref = _ref_forward_f32(x, params)
    assert probs.shape == (batch, dim_action)
    assert jnp.allclose(probs, ref, atol=2e-2, rtol=2e-2), "probs mismatch vs reference"
    assert jnp.allclose(jnp.sum(probs, axis=-1), 1.0, atol=5e-3), "probs do not sum to 1"
    assert bool(jnp.all(probs >= 0.0)), "negative probability"

    # TODO(synk): the Categorical distribution in PyTorch's forward (sample /
    # log_prob / entropy) is a thin host-side wrapper over these probs; it is
    # derived in JAX outside the kernel.
    print("KERNEL_OK")
</pallas_src>

<mosaic_0001>
module attributes {stable_mosaic.version = 11 : i64} {
  func.func @_policy_kernel(%arg0: i32, %arg1: memref<8x16xbf16, #tpu.memory_space<vmem>>, %arg2: memref<16x128xbf16, #tpu.memory_space<vmem>>, %arg3: memref<1x128xf32, #tpu.memory_space<vmem>>, %arg4: memref<128x128xbf16, #tpu.memory_space<vmem>>, %arg5: memref<1x128xf32, #tpu.memory_space<vmem>>, %arg6: memref<128x128xbf16, #tpu.memory_space<vmem>>, %arg7: memref<1x128xf32, #tpu.memory_space<vmem>>, %arg8: memref<8x128xf32, #tpu.memory_space<vmem>>) attributes {dimension_semantics = [#tpu.dimension_semantics<parallel>], iteration_bounds = array<i64: 1>, scalar_prefetch = 0 : i64, scratch_operands = 0 : i64, tpu.core_type = #tpu.core_type<tc>, window_params = [{transform_indices = @transform_0, window_bounds = array<i64: 8, 16>}, {pipeline_mode = #tpu.pipeline_mode<synchronous>, transform_indices = @transform_1, window_bounds = array<i64: 16, 128>}, {pipeline_mode = #tpu.pipeline_mode<synchronous>, transform_indices = @transform_2, window_bounds = array<i64: 1, 128>}, {pipeline_mode = #tpu.pipeline_mode<synchronous>, transform_indices = @transform_3, window_bounds = array<i64: 128, 128>}, {pipeline_mode = #tpu.pipeline_mode<synchronous>, transform_indices = @transform_4, window_bounds = array<i64: 1, 128>}, {pipeline_mode = #tpu.pipeline_mode<synchronous>, transform_indices = @transform_5, window_bounds = array<i64: 128, 128>}, {pipeline_mode = #tpu.pipeline_mode<synchronous>, transform_indices = @transform_6, window_bounds = array<i64: 1, 128>}, {transform_indices = @transform_7, window_bounds = array<i64: 8, 128>}]} {
    %c0 = arith.constant 0 : index
    %c0_0 = arith.constant 0 : index
    %0 = vector.load %arg1[%c0, %c0_0] : memref<8x16xbf16, #tpu.memory_space<vmem>>, vector<8x16xbf16>
    %c0_1 = arith.constant 0 : index
    %c0_2 = arith.constant 0 : index
    %1 = vector.load %arg2[%c0_1, %c0_2] : memref<16x128xbf16, #tpu.memory_space<vmem>>, vector<16x128xbf16>
    %cst = arith.constant dense<0.000000e+00> : vector<8x128xf32>
    %2 = tpu.matmul %0, %1, %cst {dimension_numbers = #tpu.dot_dimension_numbers<[1], [0], [0], [1], [0, 0, 1, 1], [], []>} : vector<8x16xbf16>, vector<16x128xbf16>, vector<8x128xf32> -> vector<8x128xf32>
    %c0_3 = arith.constant 0 : index
    %c0_4 = arith.constant 0 : index
    %3 = vector.load %arg3[%c0_3, %c0_4] : memref<1x128xf32, #tpu.memory_space<vmem>>, vector<1x128xf32>
    %4 = vector.broadcast %3 : vector<1x128xf32> to vector<8x128xf32>
    %5 = arith.addf %2, %4 : vector<8x128xf32>
    %cst_5 = arith.constant 0.00999999977 : f32
    %6 = vector.broadcast %cst_5 : f32 to vector<8x128xf32>
    %7 = arith.mulf %6, %5 : vector<8x128xf32>
    %8 = arith.maximumf %5, %7 : vector<8x128xf32>
    %9 = arith.truncf %8 : vector<8x128xf32> to vector<8x128xbf16>
    %c0_6 = arith.constant 0 : index
    %c0_7 = arith.constant 0 : index
    %10 = vector.load %arg4[%c0_6, %c0_7] : memref<128x128xbf16, #tpu.memory_space<vmem>>, vector<128x128xbf16>
    %cst_8 = arith.constant dense<0.000000e+00> : vector<8x128xf32>
    %11 = tpu.matmul %9, %10, %cst_8 {dimension_numbers = #tpu.dot_dimension_numbers<[1], [0], [0], [1], [0, 0, 1, 1], [], []>} : vector<8x128xbf16>, vector<128x128xbf16>, vector<8x128xf32> -> vector<8x128xf32>
    %c0_9 = arith.constant 0 : index
    %c0_10 = arith.constant 0 : index
    %12 = vector.load %arg5[%c0_9, %c0_10] : memref<1x128xf32, #tpu.memory_space<vmem>>, vector<1x128xf32>
    %13 = vector.broadcast %12 : vector<1x128xf32> to vector<8x128xf32>
    %14 = arith.addf %11, %13 : vector<8x128xf32>
    %cst_11 = arith.constant 0.00999999977 : f32
    %15 = vector.broadcast %cst_11 : f32 to vector<8x128xf32>
    %16 = arith.mulf %15, %14 : vector<8x128xf32>
    %17 = arith.maximumf %14, %16 : vector<8x128xf32>
    %18 = arith.truncf %17 : vector<8x128xf32> to vector<8x128xbf16>
    %c0_12 = arith.constant 0 : index
    %c0_13 = arith.constant 0 : index
    %19 = vector.load %arg6[%c0_12, %c0_13] : memref<128x128xbf16, #tpu.memory_space<vmem>>, vector<128x128xbf16>
    %cst_14 = arith.constant dense<0.000000e+00> : vector<8x128xf32>
    %20 = tpu.matmul %18, %19, %cst_14 {dimension_numbers = #tpu.dot_dimension_numbers<[1], [0], [0], [1], [0, 0, 1, 1], [], []>} : vector<8x128xbf16>, vector<128x128xbf16>, vector<8x128xf32> -> vector<8x128xf32>
    %c0_15 = arith.constant 0 : index
    %c0_16 = arith.constant 0 : index
    %21 = vector.load %arg7[%c0_15, %c0_16] : memref<1x128xf32, #tpu.memory_space<vmem>>, vector<1x128xf32>
    %22 = vector.broadcast %21 : vector<1x128xf32> to vector<8x128xf32>
    %23 = arith.addf %20, %22 : vector<8x128xf32>
    %cst_17 = arith.constant dense<0xFF800000> : vector<8xf32>
    %24 = vector.multi_reduction <maximumf>, %23, %cst_17 [1] : vector<8x128xf32> to vector<8xf32>
    %25 = vector.shape_cast %24 : vector<8xf32> to vector<8x1xf32>
    %26 = vector.broadcast %25 : vector<8x1xf32> to vector<8x128xf32>
    %27 = arith.subf %23, %26 : vector<8x128xf32>
    %28 = math.exp %27 : vector<8x128xf32>
    %cst_18 = arith.constant dense<0.000000e+00> : vector<8xf32>
    %29 = vector.multi_reduction <add>, %28, %cst_18 [1] : vector<8x128xf32> to vector<8xf32>
    %30 = vector.shape_cast %29 : vector<8xf32> to vector<8x1xf32>
    %31 = tpu.reciprocal %30 {approx = true} : vector<8x1xf32> -> vector<8x1xf32>
    %32 = vector.broadcast %31 : vector<8x1xf32> to vector<8x128xf32>
    %33 = arith.mulf %28, %32 : vector<8x128xf32>
    %c0_19 = arith.constant 0 : index
    %c0_20 = arith.constant 0 : index
    %34 = vector.load %arg8[%c0_19, %c0_20] : memref<8x128xf32, #tpu.memory_space<vmem>>, vector<8x128xf32>
    tpu.vector_store %arg8[%c0_19, %c0_20], %33 {strides = array<i32>} : memref<8x128xf32, #tpu.memory_space<vmem>>, vector<8x128xf32>,
    return
  }
  func.func @transform_0(%arg0: i32) -> (i32, i32) {
    %c0_i32 = arith.constant 0 : i32
    %c0_i32_0 = arith.constant 0 : i32
    return %arg0, %c0_i32 : i32, i32
  }
  func.func @transform_1(%arg0: i32) -> (i32, i32) {
    %c0_i32 = arith.constant 0 : i32
    %c0_i32_0 = arith.constant 0 : i32
    %c0_i32_1 = arith.constant 0 : i32
    return %c0_i32, %c0_i32_0 : i32, i32
  }
  func.func @transform_2(%arg0: i32) -> (i32, i32) {
    %c0_i32 = arith.constant 0 : i32
    %c0_i32_0 = arith.constant 0 : i32
    %c0_i32_1 = arith.constant 0 : i32
    return %c0_i32, %c0_i32_0 : i32, i32
  }
  func.func @transform_3(%arg0: i32) -> (i32, i32) {
    %c0_i32 = arith.constant 0 : i32
    %c0_i32_0 = arith.constant 0 : i32
    %c0_i32_1 = arith.constant 0 : i32
    return %c0_i32, %c0_i32_0 : i32, i32
  }
  func.func @transform_4(%arg0: i32) -> (i32, i32) {
    %c0_i32 = arith.constant 0 : i32
    %c0_i32_0 = arith.constant 0 : i32
    %c0_i32_1 = arith.constant 0 : i32
    return %c0_i32, %c0_i32_0 : i32, i32
  }
  func.func @transform_5(%arg0: i32) -> (i32, i32) {
    %c0_i32 = arith.constant 0 : i32
    %c0_i32_0 = arith.constant 0 : i32
    %c0_i32_1 = arith.constant 0 : i32
    return %c0_i32, %c0_i32_0 : i32, i32
  }
  func.func @transform_6(%arg0: i32) -> (i32, i32) {
    %c0_i32 = arith.constant 0 : i32
    %c0_i32_0 = arith.constant 0 : i32
    %c0_i32_1 = arith.constant 0 : i32
    return %c0_i32, %c0_i32_0 : i32, i32
  }
  func.func @transform_7(%arg0: i32) -> (i32, i32) {
    %c0_i32 = arith.constant 0 : i32
    %c0_i32_0 = arith.constant 0 : i32
    return %arg0, %c0_i32 : i32, i32
  }
}

</mosaic_0001>

<llo_original>
// kernel: tpu_custom_call.1
$region0: #{tpu_custom_call.1}
  #allocation0 [shape = 'u32[]', space=smem, size = 0x4, offset = 0x4, fixed_abs, tag = 'smem constant byte address 0x4 - core index']
  #allocation1 [shape = 'u32[144,128]{1,0:T(1,128)}', space=vmem, size = 0x12000, scoped, tag = 'internal scratch']
  %s0 = inlined_call_operand.hbm [shape: bf16[8,16], index: 0, kind: input, shape index: {}]
  %s1 = inlined_call_operand.hbm [shape: bf16[16,128], index: 1, kind: input, shape index: {}]
  %s2 = inlined_call_operand.vmem [shape: f32[1,128], index: 2, kind: input, shape index: {}]
  %s3 = inlined_call_operand.hbm [shape: bf16[128,128], index: 3, kind: input, shape index: {}]
  %s4 = inlined_call_operand.vmem [shape: f32[1,128], index: 4, kind: input, shape index: {}]
  %s5 = inlined_call_operand.hbm [shape: bf16[128,128], index: 5, kind: input, shape index: {}]
  %s6 = inlined_call_operand.vmem [shape: f32[1,128], index: 6, kind: input, shape index: {}]
  %s7 = inlined_call_operand.hbm [shape: f32[8,128], index: 7, kind: output, shape index: {}]
  %s8 = sld [smem:[#allocation0]]
  $region54: #{tpu_custom_call.1} parent=0
    _
  %s10 = ssub.s32 1, %s8
  %s11 = scalar_select 0, %s10, %s8
  $region1: #{tpu_custom_call.1} parent=0
    #allocation2 [shape = 'u8[2048]{0}', space=vmem, size = 0x800, scoped, tag = 'input window, operand 0, single buffered']
    #allocation3 [shape = 's32[1]{0}', space=sflag, size = 0x4, scoped, tag = 'scoped memory for tpu_custom_call.1']
    #allocation4 [shape = 's32[1]{0}', space=sflag, size = 0x4, scoped, tag = 'scoped memory for tpu_custom_call.1']
    #allocation5 [shape = 'u8[4096]{0}', space=vmem, size = 0x1000, scoped, tag = 'input window, operand 1, single buffered']
    #allocation6 [shape = 's32[1]{0}', space=sflag, size = 0x4, scoped, tag = 'scoped memory for tpu_custom_call.1']
    #allocation7 [shape = 'u8[32768]{0}', space=vmem, size = 0x8000, scoped, tag = 'input window, operand 3, single buffered']
    #allocation8 [shape = 'u8[32768]{0}', space=vmem, size = 0x8000, scoped, tag = 'input window, operand 5, single buffered']
    #allocation9 [shape = 's32[1]{0}', space=sflag, size = 0x4, scoped, tag = 'scoped memory for tpu_custom_call.1']
    #allocation10 [shape = 'u8[4096]{0}', space=vmem, size = 0x1000, scoped, tag = 'output window, operand 0, single buffered']
    %12 = vsyncpa [#allocation3], 0
    %13 = vsyncpa [#allocation6], 0
    %14 = vsyncpa [#allocation9], 0
    %15 = vsyncpa [#allocation4], 0
    // Predicated region
    $region2: #{tpu_custom_call.1} parent=1 // pred_check
      _
    $region3: #{tpu_custom_call.1} parent=1 // pred_check_branch
      %17 = sbr.rel (0) target = $region5
    $region4: #{tpu_custom_call.1} parent=1 // pred_region
      %s19 = ssub.s32 64, 64
      %20 = vsyncadd [#allocation3], %s19
      %s22 = sshll.u32 [#allocation2], 4
      %s23 = int_to_ptr.vmem [resolvable:$true] %s22
      %25 = dma.hbm_to_vmem [thread:$0]  %s0, 64, %s23, [#allocation3]
    $region5: #{tpu_custom_call.1} parent=1 // pred_fallthru
      _
    // Predicated region
    $region6: #{tpu_custom_call.1} parent=1 // pred_check
      _
    $region7: #{tpu_custom_call.1} parent=1 // pred_check_branch
      %27 = sbr.rel (0) target = $region9
    $region8: #{tpu_custom_call.1} parent=1 // pred_region
      %s29 = ssub.s32 128, 128
      %30 = vsyncadd [#allocation6], %s29
      %s31 = sshll.u32 [#allocation5], 4
      %s32 = int_to_ptr.vmem [resolvable:$true] %s31
      %37 = dma.hbm_to_vmem [thread:$0]  %s1, 128, %s32, [#allocation6], 64, 64, 4
    $region9: #{tpu_custom_call.1} parent=1 // pred_fallthru
      _
    // Predicated region
    $region10: #{tpu_custom_call.1} parent=1 // pred_check
      _
    $region11: #{tpu_custom_call.1} parent=1 // pred_check_branch
      %39 = sbr.rel (0) target = $region13
    $region12: #{tpu_custom_call.1} parent=1 // pred_region
      _
    $region13: #{tpu_custom_call.1} parent=1 // pred_fallthru
      _
    // Predicated region
    $region14: #{tpu_custom_call.1} parent=1 // pred_check
      _
    $region15: #{tpu_custom_call.1} parent=1 // pred_check_branch
      %41 = sbr.rel (0) target = $region17
    $region16: #{tpu_custom_call.1} parent=1 // pred_region
      %s43 = ssub.s32 1024, 1024
      %44 = vsyncadd [#allocation6], %s43
      %s45 = sshll.u32 [#allocation7], 4
      %s46 = int_to_ptr.vmem [resolvable:$true] %s45
      %51 = dma.hbm_to_vmem [thread:$0]  %s3, 1024, %s46, [#allocation6], 64, 64, 4
    $region17: #{tpu_custom_call.1} parent=1 // pred_fallthru
      _
    // Predicated region
    $region18: #{tpu_custom_call.1} parent=1 // pred_check
      _
    $region19: #{tpu_custom_call.1} parent=1 // pred_check_branch
      %53 = sbr.rel (0) target = $region21
    $region20: #{tpu_custom_call.1} parent=1 // pred_region
      _
    $region21: #{tpu_custom_call.1} parent=1 // pred_fallthru
      _
    // Predicated region
    $region22: #{tpu_custom_call.1} parent=1 // pred_check
      _
    $region23: #{tpu_custom_call.1} parent=1 // pred_check_branch
      %55 = sbr.rel (0) target = $region25
    $region24: #{tpu_custom_call.1} parent=1 // pred_region
      %s57 = ssub.s32 1024, 1024
      %58 = vsyncadd [#allocation9], %s57
      %s59 = sshll.u32 [#allocation8], 4
      %s60 = int_to_ptr.vmem [resolvable:$true] %s59
      %65 = dma.hbm_to_vmem [thread:$0]  %s5, 1024, %s60, [#allocation9], 64, 64, 4
    $region25: #{tpu_custom_call.1} parent=1 // pred_fallthru
      _
    // Predicated region
    $region26: #{tpu_custom_call.1} parent=1 // pred_check
      _
    $region27: #{tpu_custom_call.1} parent=1 // pred_check_branch
      %67 = sbr.rel (0) target = $region29
    $region28: #{tpu_custom_call.1} parent=1 // pred_region
      _
    $region29: #{tpu_custom_call.1} parent=1 // pred_fallthru
      _
    // Predicated region
    $region30: #{tpu_custom_call.1} parent=1 // pred_check
      _
    $region31: #{tpu_custom_call.1} parent=1 // pred_check_branch
      %69 = sbr.rel (0) target = $region33
    $region32: #{tpu_custom_call.1} parent=1 // pred_region
      %70 = dma.done [#allocation3], 64
    $region33: #{tpu_custom_call.1} parent=1 // pred_fallthru
      _
    // Predicated region
    $region34: #{tpu_custom_call.1} parent=1 // pred_check
      _
    $region35: #{tpu_custom_call.1} parent=1 // pred_check_branch
      %72 = sbr.rel (0) target = $region37
    $region36: #{tpu_custom_call.1} parent=1 // pred_region
      %73 = dma.done [#allocation6], 128
    $region37: #{tpu_custom_call.1} parent=1 // pred_fallthru
      _
    // Predicated region
    $region38: #{tpu_custom_call.1} parent=1 // pred_check
      _
    $region39: #{tpu_custom_call.1} parent=1 // pred_check_branch
      %75 = sbr.rel (0) target = $region41
    $region40: #{tpu_custom_call.1} parent=1 // pred_region
      %76 = dma.done [#allocation6], 1024
    $region41: #{tpu_custom_call.1} parent=1 // pred_fallthru
      _
    // Predicated region
    $region42: #{tpu_custom_call.1} parent=1 // pred_check
      _
    $region43: #{tpu_custom_call.1} parent=1 // pred_check_branch
      %78 = sbr.rel (0) target = $region45
    $region44: #{tpu_custom_call.1} parent=1 // pred_region
      %79 = dma.done [#allocation9], 1024
    $region45: #{tpu_custom_call.1} parent=1 // pred_fallthru
      _
    %v81 = vld [vmem:[#allocation2] sm:$0xf]
    %v82 = vld [vmem:[#allocation5] sm:$0xf]
    %v83 = vld [vmem:[#allocation5 + $0x4] sm:$0xf]
    %v84 = vld [vmem:[%s2] sm:$0x1]
    %v86 = vlaneseq
    %v87 = vshrl.u32 %v86, 7
    %v88 = vsub.s32 0, %v87
    %v89 = vrot.slane %v84, %v88
    %v93 = vunpack.c.l.b16 %v82
    %v94 = vunpack.c.l.b16 %v83
    %v95 = vpack.c.b16 %v94, %v93
    %vm97 = vcmask 130048
    %v99 = vsel %vm97, %v81, 0
    %101 = vmatprep.subr.bf16.mxu0 0
    %102 = vmatpush1.bf16.msra.mxu0 %v95
    %103 = vmatprep.subr.bf16.mxu0 0
    %104 = vmatpush1.bf16.msra.mxu0 0
    %105 = vmatprep.subr.bf16.mxu0 0
    %106 = vmatpush1.bf16.msra.mxu0 0
    %107 = vmatprep.subr.bf16.mxu0 0
    %108 = vmatpush1.bf16.msra.mxu0 0
    %109 = vmatprep.subr.bf16.mxu0 0
    %110 = vmatpush1.bf16.msra.mxu0 0
    %111 = vmatprep.subr.bf16.mxu0 0
    %112 = vmatpush1.bf16.msra.mxu0 0
    %113 = vmatprep.subr.bf16.mxu0 0
    %114 = vmatpush1.bf16.msra.mxu0 0
    %115 = vmatprep.subr.bf16.mxu0 0
    %116 = vmatpush1.bf16.msra.mxu0 0
    %117 = vmatprep.subr.bf16.mxu0 0
    %118 = vmatpush1.bf16.msra.mxu0 0
    %119 = vmatprep.subr.bf16.mxu0 0
    %120 = vmatpush1.bf16.msra.mxu0 0
    %121 = vmatprep.subr.bf16.mxu0 0
    %122 = vmatpush1.bf16.msra.mxu0 0
    %123 = vmatprep.subr.bf16.mxu0 0
    %124 = vmatpush1.bf16.msra.mxu0 0
    %125 = vmatprep.subr.bf16.mxu0 0
    %126 = vmatpush1.bf16.msra.mxu0 0
    %127 = vmatprep.subr.bf16.mxu0 0
    %128 = vmatpush1.bf16.msra.mxu0 0
    %129 = vmatprep.subr.bf16.mxu0 0
    %130 = vmatpush1.bf16.msra.mxu0 0
    %131 = vmatprep.subr.bf16.mxu0 0
    %132 = vmatpush1.bf16.msra.mxu0 0
    %133 = vmatprep.mubr.bf16.mxu0 0
    %134 = vmatmul.mubr.bf16.gmra.mrb[0].mxu0 %v99
    %v135 = vpop.f32.mrb[0].mxu0
    %v136 = vadd.f32 %v89, %v135
    %v137 = vpop.f32.mrb[0].mxu0
    %v138 = vpop.f32.mrb[0].mxu0
    %v139 = vpop.f32.mrb[0].mxu0
    %140 = vdwg.mxu0
    %v141 = vmul.f32 %v136, 0.01
    %v142 = vmax.f32 %v136, %v141
    %v143 = vpack.c.bf16 %v142, %v142
    %v144 = vld [vmem:[#allocation7] sm:$0xf]
    %v145 = vld [vmem:[#allocation7 + $0x4] sm:$0xf]
    %v146 = vld [vmem:[#allocation7 + $0x8] sm:$0xf]
    %v147 = vld [vmem:[#allocation7 + $0xc] sm:$0xf]
    %v148 = vld [vmem:[#allocation7 + $0x10] sm:$0xf]
    %v149 = vld [vmem:[#allocation7 + $0x14] sm:$0xf]
    %v150 = vld [vmem:[#allocation7 + $0x18] sm:$0xf]
    %v151 = vld [vmem:[#allocation7 + $0x1c] sm:$0xf]
    %v152 = vld [vmem:[#allocation7 + $0x20] sm:$0xf]
    %v153 = vld [vmem:[#allocation7 + $0x24] sm:$0xf]
    %v154 = vld [vmem:[#allocation7 + $0x28] sm:$0xf]
    %v155 = vld [vmem:[#allocation7 + $0x2c] sm:$0xf]
    %v156 = vld [vmem:[#allocation7 + $0x30] sm:$0xf]
    %v157 = vld [vmem:[#allocation7 + $0x34] sm:$0xf]
    %v158 = vld [vmem:[#allocation7 + $0x38] sm:$0xf]
    %v159 = vld [vmem:[#allocation7 + $0x3c] sm:$0xf]
    %v160 = vld [vmem:[%s4] sm:$0x1]
    %v162 = vlaneseq
    %v163 = vshrl.u32 %v162, 7
    %v164 = vsub.s32 0, %v163
    %v165 = vrot.slane %v160, %v164
    %v183 = vunpack.c.l.b16 %v144
    %v184 = vunpack.c.l.b16 %v145
    %v185 = vunpack.c.l.b16 %v146
    %v186 = vunpack.c.l.b16 %v147
    %v187 = vunpack.c.l.b16 %v148
    %v188 = vunpack.c.l.b16 %v149
    %v189 = vunpack.c.l.b16 %v150
    %v190 = vunpack.c.l.b16 %v151
    %v191 = vunpack.c.l.b16 %v152
    %v192 = vunpack.c.l.b16 %v153
    %v193 = vunpack.c.l.b16 %v154
    %v194 = vunpack.c.l.b16 %v155
    %v195 = vunpack.c.l.b16 %v156
    %v196 = vunpack.c.l.b16 %v157
    %v197 = vunpack.c.l.b16 %v158
    %v198 = vunpack.c.l.b16 %v159
    %v199 = vpack.c.b16 %v184, %v183
    %v200 = vpack.c.b16 %v186, %v185
    %v201 = vpack.c.b16 %v188, %v187
    %v202 = vpack.c.b16 %v190, %v189
    %v203 = vpack.c.b16 %v192, %v191
    %v204 = vpack.c.b16 %v194, %v193
    %v205 = vpack.c.b16 %v196, %v195
    %v206 = vpack.c.b16 %v198, %v197
    %215 = vmatprep.subr.bf16.mxu0 0
    %216 = vmatpush1.bf16.msra.mxu0 %v199
    %217 = vmatprep.subr.bf16.mxu0 0
    %218 = vmatpush1.bf16.msra.mxu0 %v200
    %219 = vmatprep.subr.bf16.mxu0 0
    %220 = vmatpush1.bf16.msra.mxu0 %v201
    %221 = vmatprep.subr.bf16.mxu0 0
    %222 = vmatpush1.bf16.msra.mxu0 %v202
    %223 = vmatprep.subr.bf16.mxu0 0
    %224 = vmatpush1.bf16.msra.mxu0 %v203
    %225 = vmatprep.subr.bf16.mxu0 0
    %226 = vmatpush1.bf16.msra.mxu0 %v204
    %227 = vmatprep.subr.bf16.mxu0 0
    %228 = vmatpush1.bf16.msra.mxu0 %v205
    %229 = vmatprep.subr.bf16.mxu0 0
    %230 = vmatpush1.bf16.msra.mxu0 %v206
    %231 = vmatprep.subr.bf16.mxu0 0
    %232 = vmatpush1.bf16.msra.mxu0 0
    %233 = vmatprep.subr.bf16.mxu0 0
    %234 = vmatpush1.bf16.msra.mxu0 0
    %235 = vmatprep.subr.bf16.mxu0 0
    %236 = vmatpush1.bf16.msra.mxu0 0
    %237 = vmatprep.subr.bf16.mxu0 0
    %238 = vmatpush1.bf16.msra.mxu0 0
    %239 = vmatprep.subr.bf16.mxu0 0
    %240 = vmatpush1.bf16.msra.mxu0 0
    %241 = vmatprep.subr.bf16.mxu0 0
    %242 = vmatpush1.bf16.msra.mxu0 0
    %243 = vmatprep.subr.bf16.mxu0 0
    %244 = vmatpush1.bf16.msra.mxu0 0
    %245 = vmatprep.subr.bf16.mxu0 0
    %246 = vmatpush1.bf16.msra.mxu0 0
    %247 = vmatprep.mubr.bf16.mxu0 0
    %248 = vmatmul.mubr.bf16.gmra.mrb[0].mxu0 %v143
    %v249 = vpop.f32.mrb[0].mxu0
    %v250 = vadd.f32 %v165, %v249
    %v251 = vpop.f32.mrb[0].mxu0
    %v252 = vpop.f32.mrb[0].mxu0
    %v253 = vpop.f32.mrb[0].mxu0
    %254 = vdwg.mxu0
    %v255 = vmul.f32 %v250, 0.01
    %v256 = vmax.f32 %v250, %v255
    %v257 = vpack.c.bf16 %v256, %v256
    %v258 = vld [vmem:[#allocation8] sm:$0xf]
    %v259 = vld [vmem:[#allocation8 + $0x4] sm:$0xf]
    %v260 = vld [vmem:[#allocation8 + $0x8] sm:$0xf]
    %v261 = vld [vmem:[#allocation8 + $0xc] sm:$0xf]
    %v262 = vld [vmem:[#allocation8 + $0x10] sm:$0xf]
    %v263 = vld [vmem:[#allocation8 + $0x14] sm:$0xf]
    %v264 = vld [vmem:[#allocation8 + $0x18] sm:$0xf]
    %v265 = vld [vmem:[#allocation8 + $0x1c] sm:$0xf]
    %v266 = vld [vmem:[#allocation8 + $0x20] sm:$0xf]
    %v267 = vld [vmem:[#allocation8 + $0x24] sm:$0xf]
    %v268 = vld [vmem:[#allocation8 + $0x28] sm:$0xf]
    %v269 = vld [vmem:[#allocation8 + $0x2c] sm:$0xf]
    %v270 = vld [vmem:[#allocation8 + $0x30] sm:$0xf]
    %v271 = vld [vmem:[#allocation8 + $0x34] sm:$0xf]
    %v272 = vld [vmem:[#allocation8 + $0x38] sm:$0xf]
    %v273 = vld [vmem:[#allocation8 + $0x3c] sm:$0xf]
    %v274 = vld [vmem:[%s6] sm:$0x1]
    %v276 = vlaneseq
    %v277 = vshrl.u32 %v276, 7
    %v278 = vsub.s32 0, %v277
    %v279 = vrot.slane %v274, %v278
    %v297 = vunpack.c.l.b16 %v258
    %v298 = vunpack.c.l.b16 %v259
    %v299 = vunpack.c.l.b16 %v260
    %v300 = vunpack.c.l.b16 %v261
    %v301 = vunpack.c.l.b16 %v262
    %v302 = vunpack.c.l.b16 %v263
    %v303 = vunpack.c.l.b16 %v264
    %v304 = vunpack.c.l.b16 %v265
    %v305 = vunpack.c.l.b16 %v266
    %v306 = vunpack.c.l.b16 %v267
    %v307 = vunpack.c.l.b16 %v268
    %v308 = vunpack.c.l.b16 %v269
    %v309 = vunpack.c.l.b16 %v270
    %v310 = vunpack.c.l.b16 %v271
    %v311 = vunpack.c.l.b16 %v272
    %v312 = vunpack.c.l.b16 %v273
    %v313 = vpack.c.b16 %v298, %v297
    %v314 = vpack.c.b16 %v300, %v299
    %v315 = vpack.c.b16 %v302, %v301
    %v316 = vpack.c.b16 %v304, %v303
    %v317 = vpack.c.b16 %v306, %v305
    %v318 = vpack.c.b16 %v308, %v307
    %v319 = vpack.c.b16 %v310, %v309
    %v320 = vpack.c.b16 %v312, %v311
    %329 = vmatprep.subr.bf16.mxu0 0
    %330 = vmatpush1.bf16.msra.mxu0 %v313
    %331 = vmatprep.subr.bf16.mxu0 0
    %332 = vmatpush1.bf16.msra.mxu0 %v314
    %333 = vmatprep.subr.bf16.mxu0 0
    %334 = vmatpush1.bf16.msra.mxu0 %v315
    %335 = vmatprep.subr.bf16.mxu0 0
    %336 = vmatpush1.bf16.msra.mxu0 %v316
    %337 = vmatprep.subr.bf16.mxu0 0
    %338 = vmatpush1.bf16.msra.mxu0 %v317
    %339 = vmatprep.subr.bf16.mxu0 0
    %340 = vmatpush1.bf16.msra.mxu0 %v318
    %341 = vmatprep.subr.bf16.mxu0 0
    %342 = vmatpush1.bf16.msra.mxu0 %v319
    %343 = vmatprep.subr.bf16.mxu0 0
    %344 = vmatpush1.bf16.msra.mxu0 %v320
    %345 = vmatprep.subr.bf16.mxu0 0
    %346 = vmatpush1.bf16.msra.mxu0 0
    %347 = vmatprep.subr.bf16.mxu0 0
    %348 = vmatpush1.bf16.msra.mxu0 0
    %349 = vmatprep.subr.bf16.mxu0 0
    %350 = vmatpush1.bf16.msra.mxu0 0
    %351 = vmatprep.subr.bf16.mxu0 0
    %352 = vmatpush1.bf16.msra.mxu0 0
    %353 = vmatprep.subr.bf16.mxu0 0
    %354 = vmatpush1.bf16.msra.mxu0 0
    %355 = vmatprep.subr.bf16.mxu0 0
    %356 = vmatpush1.bf16.msra.mxu0 0
    %357 = vmatprep.subr.bf16.mxu0 0
    %358 = vmatpush1.bf16.msra.mxu0 0
    %359 = vmatprep.subr.bf16.mxu0 0
    %360 = vmatpush1.bf16.msra.mxu0 0
    %361 = vmatprep.mubr.bf16.mxu0 0
    %362 = vmatmul.mubr.bf16.gmra.mrb[0].mxu0 %v257
    %v363 = vpop.f32.mrb[0].mxu0
    %v364 = vadd.f32 %v279, %v363
    %v365 = vpop.f32.mrb[0].mxu0
    %v366 = vpop.f32.mrb[0].mxu0
    %v367 = vpop.f32.mrb[0].mxu0
    %368 = vdwg.mxu0
    %369 = vmax.xlane.f32.xlu0 %v364
    %v370 = vpop.xlane.xlu0 %369
    %v371 = vsub.f32 %v364, %v370
    %v372 = vmul.f32 %v371, 1.442695
    %v373 = vpow.pop %v372
    %374 = vadd.xlane.f32.xlu0 %v373
    %v375 = vpop.xlane.xlu0 %374
    %v376 = vrcp.pop %v375
    %v377 = vmul.f32 %v373, %v376
    %378 = vst [vmem:[#allocation10] sm:$0xff] %v377
    // Predicated region
    $region46: #{tpu_custom_call.1} parent=1 // pred_check
      _
    $region47: #{tpu_custom_call.1} parent=1 // pred_check_branch
      %380 = sbr.rel (0) target = $region49
    $region48: #{tpu_custom_call.1} parent=1 // pred_region
      %s382 = ssub.s32 128, 128
      %383 = vsyncadd [#allocation4], %s382
      %s385 = sshll.u32 [#allocation10], 4
      %s386 = int_to_ptr.vmem [resolvable:$true] %s385
      %388 = dma.vmem_to_hbm [thread:$0]  %s386, 128, %s7, [#allocation4]
    $region49: #{tpu_custom_call.1} parent=1 // pred_fallthru
      _
    // Predicated region
    $region50: #{tpu_custom_call.1} parent=1 // pred_check
      _
    $region51: #{tpu_custom_call.1} parent=1 // pred_check_branch
      %390 = sbr.rel (0) target = $region53
    $region52: #{tpu_custom_call.1} parent=1 // pred_region
      %391 = dma.done [#allocation4], 128
    $region53: #{tpu_custom_call.1} parent=1 // pred_fallthru
      _
    %392 = vsyncpa [#allocation3], 1
    %393 = vsyncpa [#allocation6], 1
    %394 = vsyncpa [#allocation9], 1
    %395 = vsyncpa [#allocation4], 1

</llo_original>
